<compile_context>
chip_gen: v6e
topology: v6e:2x2x1
jax: 0.10.0
libtpu: 0.0.40
codegen_flags: <defaults>
</compile_context>

<pallas_src>
import jax
import jax.numpy as jnp
from jax import lax
from jax.experimental import pallas as pl
from jax.experimental.pallas import tpu as pltpu


def _news_rnn_kernel(x_ref,      # (T, TB, E)  embedded tokens, time-major (batch tile)
                     wih_ref,    # (E, H)      RNNCell input->hidden weight (transposed vs torch)
                     whh_ref,    # (H, H)      RNNCell hidden->hidden weight (transposed vs torch)
                     brnn_ref,   # (1, H)      b_ih + b_hh
                     w1_ref,     # (H, H)      classifier fc1 weight (transposed vs torch)
                     b1_ref,     # (1, H)
                     w2_ref,     # (H, CPAD)   classifier fc2 weight, lane-padded
                     b2_ref,     # (1, CPAD)
                     out_ref):   # (TB, CPAD)
    T, TB, E = x_ref.shape
    H = whh_ref.shape[0]

    # ---- Hoisted input projection: one big (T*TB, E) @ (E, H) matmul.
    # TB is a multiple of 8 (sublane), so merging (T, TB) into the row axis is
    # layout-trivial (no relayout copy).  Bias folded in once, not per step.
    x_flat = x_ref[...].reshape(T * TB, E)
    xw = (jnp.dot(x_flat, wih_ref[...], preferred_element_type=jnp.float32)
          + brnn_ref[...]).reshape(T, TB, H)      # stays a value (vreg-resident)

    # ---- Serial recurrence: h_t = tanh(xw_t + h_{t-1} @ W_hh)
    # Statically unrolled; only one MXU push per step on the critical path and
    # no VMEM scratch traffic for xw.
    whh = whh_ref[...]
    h = jnp.zeros((TB, H), jnp.float32)
    for t in range(T):                            # T is small & static here
        h = jnp.tanh(xw[t] + jnp.dot(h, whh, preferred_element_type=jnp.float32))

    # ---- Classifier on the last hidden state:
    #   Dropout (identity, eval) -> Linear -> ReLU -> Dropout (identity) -> Linear
    z = jnp.dot(h, w1_ref[...], preferred_element_type=jnp.float32) + b1_ref[...]
    z = jnp.maximum(z, 0.0)                       # ReLU
    logits = jnp.dot(z, w2_ref[...], preferred_element_type=jnp.float32) + b2_ref[...]
    out_ref[...] = logits.astype(out_ref.dtype)   # lane-dense (TB, CPAD) store


def pad_classifier_head(w2, b2):
    """Precompute the lane-dense (128-multiple) padding of the fc2 head once."""
    C = w2.shape[1]
    CPAD = ((C + 127) // 128) * 128
    w2p = jnp.pad(w2, ((0, 0), (0, CPAD - C)))
    b2p = jnp.pad(b2, ((0, 0), (0, CPAD - C)))
    return w2p, b2p, C


def _default_num_batch_tiles():
    """1 tile on single-TC chips (v5e/v6e); 2 tiles on v7x (2 TensorCores)."""
    try:
        kind = getattr(jax.devices()[0], "device_kind", "") or ""
        if "v7" in kind.lower():
            return 2
    except Exception:  # pragma: no cover - defensive only
        pass
    return 1


def news_classifier_forward(tokens, emb_w, wih, whh, b_rnn, w1, b1, w2p, b2p,
                            num_classes, *, num_batch_tiles=None):
    """Full forward pass.

    tokens : (B, T) int32 indices
    emb_w  : (V, E) embedding table (row padding_idx already zeroed)
    w2p/b2p: lane-padded fc2 head from pad_classifier_head()
    """
    B, T = tokens.shape
    E = emb_w.shape[1]
    H = whh.shape[0]
    CPAD = w2p.shape[1]

    nt = num_batch_tiles if num_batch_tiles is not None else _default_num_batch_tiles()
    nt = max(1, int(nt))
    TB = -(-B // nt)                  # ceil(B / nt)
    TB = -(-TB // 8) * 8              # round up to sublane multiple
    Bp = TB * nt
    if Bp != B:
        # Pad batch with padding_idx (=0) token rows; sliced off the output.
        tokens = jnp.pad(tokens, ((0, Bp - B), (0, 0)))

    # Embedding lookup, gathered time-major directly (no separate transpose pass).
    x_tm = jnp.take(emb_w, tokens.T, axis=0)      # (T, Bp, E)

    flops = (2 * T * Bp * E * H        # input projection
             + 2 * T * Bp * H * H      # recurrence
             + 2 * Bp * H * H          # fc1
             + 2 * Bp * H * CPAD)      # fc2
    bytes_accessed = 4 * (T * Bp * E + E * H + H * H + H
                          + H * H + H + H * CPAD + CPAD + Bp * CPAD)

    out = pl.pallas_call(
        _news_rnn_kernel,
        out_shape=jax.ShapeDtypeStruct((Bp, CPAD), jnp.float32),
        grid_spec=pltpu.PrefetchScalarGridSpec(
            num_scalar_prefetch=0,
            grid=(nt,),
            in_specs=[
                pl.BlockSpec((T, TB, E), lambda b: (0, b, 0)),
                pl.BlockSpec((E, H), lambda b: (0, 0)),
                pl.BlockSpec((H, H), lambda b: (0, 0)),
                pl.BlockSpec((1, H), lambda b: (0, 0)),
                pl.BlockSpec((H, H), lambda b: (0, 0)),
                pl.BlockSpec((1, H), lambda b: (0, 0)),
                pl.BlockSpec((H, CPAD), lambda b: (0, 0)),
                pl.BlockSpec((1, CPAD), lambda b: (0, 0)),
            ],
            out_specs=pl.BlockSpec((TB, CPAD), lambda b: (b, 0)),
        ),
        compiler_params=pltpu.CompilerParams(
            dimension_semantics=("parallel",)),   # 1 tile on v5e/v6e, 2 on v7x
        cost_estimate=pl.CostEstimate(
            flops=flops, transcendentals=T * Bp * H, bytes_accessed=bytes_accessed),
    )(x_tm, wih, whh, b_rnn, w1, b1, w2p, b2p)

    return out[:B, :num_classes]


def _uniform(key, shape, bound):
    return jax.random.uniform(key, shape, jnp.float32, minval=-bound, maxval=bound)


if __name__ == "__main__":
    # Small, module-consistent shapes.
    VOCAB = 50        # num_embeddings
    NUM_CLASSES = 4   # num_classes
    E = 32            # embedding_size
    H = 32            # hidden_size
    B = 16            # batch
    T = 8             # sequence length
    PADDING_IDX = 0

    key = jax.random.PRNGKey(0)
    keys = jax.random.split(key, 10)

    # Deterministic parameter init (PyTorch-style uniform bounds).
    emb_w = jax.random.normal(keys[0], (VOCAB, E), jnp.float32)
    emb_w = emb_w.at[PADDING_IDX].set(0.0)        # padding_idx row is zero

    bound_rnn = 1.0 / jnp.sqrt(H)
    # Stored already transposed relative to torch (in_features, out_features).
    wih = _uniform(keys[1], (E, H), bound_rnn)
    whh = _uniform(keys[2], (H, H), bound_rnn)
    b_ih = _uniform(keys[3], (1, H), bound_rnn)
    b_hh = _uniform(keys[4], (1, H), bound_rnn)
    b_rnn = b_ih + b_hh

    bound_fc1 = 1.0 / jnp.sqrt(H)
    w1 = _uniform(keys[5], (H, H), bound_fc1)
    b1 = _uniform(keys[6], (1, H), bound_fc1)
    w2 = _uniform(keys[7], (H, NUM_CLASSES), bound_fc1)
    b2 = _uniform(keys[8], (1, NUM_CLASSES), bound_fc1)

    # Lane-dense fc2 head padding, computed once (not per forward call).
    w2p, b2p, C = pad_classifier_head(w2, b2)

    # Token ids (batch_first input: (batch_size, seq_len)).
    tokens = jax.random.randint(keys[9], (B, T), 0, VOCAB, dtype=jnp.int32)

    out = news_classifier_forward(tokens, emb_w, wih, whh, b_rnn,
                                  w1, b1, w2p, b2p, C)
    out = jax.block_until_ready(out)

    # Pure-JAX reference check of the same math.
    x_emb = jnp.take(emb_w, tokens, axis=0)       # (B, T, E)
    h = jnp.zeros((B, H), jnp.float32)
    for t in range(T):
        h = jnp.tanh(x_emb[:, t, :] @ wih + h @ whh + b_rnn)
    ref = jnp.maximum(h @ w1 + b1, 0.0) @ w2 + b2
    assert out.shape == (B, NUM_CLASSES)
    assert jnp.allclose(out, ref, atol=1e-5, rtol=1e-5)

    print("KERNEL_OK")
</pallas_src>

<mosaic_0001>
module attributes {stable_mosaic.version = 11 : i64} {
  func.func @_news_rnn_kernel(%arg0: i32, %arg1: memref<8x16x32xf32, #tpu.memory_space<vmem>>, %arg2: memref<32x32xf32, #tpu.memory_space<vmem>>, %arg3: memref<32x32xf32, #tpu.memory_space<vmem>>, %arg4: memref<1x32xf32, #tpu.memory_space<vmem>>, %arg5: memref<32x32xf32, #tpu.memory_space<vmem>>, %arg6: memref<1x32xf32, #tpu.memory_space<vmem>>, %arg7: memref<32x128xf32, #tpu.memory_space<vmem>>, %arg8: memref<1x128xf32, #tpu.memory_space<vmem>>, %arg9: memref<16x128xf32, #tpu.memory_space<vmem>>) attributes {dimension_semantics = [#tpu.dimension_semantics<parallel>], iteration_bounds = array<i64: 1>, scalar_prefetch = 0 : i64, scratch_operands = 0 : i64, tpu.core_type = #tpu.core_type<tc>, window_params = [{transform_indices = @transform_0, window_bounds = array<i64: 8, 16, 32>}, {pipeline_mode = #tpu.pipeline_mode<synchronous>, transform_indices = @transform_1, window_bounds = array<i64: 32, 32>}, {pipeline_mode = #tpu.pipeline_mode<synchronous>, transform_indices = @transform_2, window_bounds = array<i64: 32, 32>}, {pipeline_mode = #tpu.pipeline_mode<synchronous>, transform_indices = @transform_3, window_bounds = array<i64: 1, 32>}, {pipeline_mode = #tpu.pipeline_mode<synchronous>, transform_indices = @transform_4, window_bounds = array<i64: 32, 32>}, {pipeline_mode = #tpu.pipeline_mode<synchronous>, transform_indices = @transform_5, window_bounds = array<i64: 1, 32>}, {pipeline_mode = #tpu.pipeline_mode<synchronous>, transform_indices = @transform_6, window_bounds = array<i64: 32, 128>}, {pipeline_mode = #tpu.pipeline_mode<synchronous>, transform_indices = @transform_7, window_bounds = array<i64: 1, 128>}, {transform_indices = @transform_8, window_bounds = array<i64: 16, 128>}]} {
    %c0 = arith.constant 0 : index
    %c0_0 = arith.constant 0 : index
    %c0_1 = arith.constant 0 : index
    %0 = vector.load %arg1[%c0, %c0_0, %c0_1] : memref<8x16x32xf32, #tpu.memory_space<vmem>>, vector<8x16x32xf32>
    %1 = vector.shape_cast %0 : vector<8x16x32xf32> to vector<128x32xf32>
    %c0_2 = arith.constant 0 : index
    %c0_3 = arith.constant 0 : index
    %2 = vector.load %arg2[%c0_2, %c0_3] : memref<32x32xf32, #tpu.memory_space<vmem>>, vector<32x32xf32>
    %cst = arith.constant dense<0.000000e+00> : vector<128x32xf32>
    %3 = tpu.matmul %1, %2, %cst {dimension_numbers = #tpu.dot_dimension_numbers<[1], [0], [0], [1], [0, 0, 1, 1], [], []>} : vector<128x32xf32>, vector<32x32xf32>, vector<128x32xf32> -> vector<128x32xf32>
    %c0_4 = arith.constant 0 : index
    %c0_5 = arith.constant 0 : index
    %4 = vector.load %arg4[%c0_4, %c0_5] : memref<1x32xf32, #tpu.memory_space<vmem>>, vector<1x32xf32>
    %5 = vector.broadcast %4 : vector<1x32xf32> to vector<128x32xf32>
    %6 = arith.addf %3, %5 : vector<128x32xf32>
    %7 = vector.shape_cast %6 : vector<128x32xf32> to vector<8x16x32xf32>
    %c0_6 = arith.constant 0 : index
    %c0_7 = arith.constant 0 : index
    %8 = vector.load %arg3[%c0_6, %c0_7] : memref<32x32xf32, #tpu.memory_space<vmem>>, vector<32x32xf32>
    %cst_8 = arith.constant 0.000000e+00 : f32
    %9 = vector.broadcast %cst_8 : f32 to vector<16x32xf32>
    %10 = vector.extract_strided_slice %7 {offsets = [0, 0, 0], sizes = [1, 16, 32], strides = [1, 1, 1]} : vector<8x16x32xf32> to vector<1x16x32xf32>
    %11 = vector.shape_cast %10 : vector<1x16x32xf32> to vector<16x32xf32>
    %cst_9 = arith.constant dense<0.000000e+00> : vector<16x32xf32>
    %12 = tpu.matmul %9, %8, %cst_9 {dimension_numbers = #tpu.dot_dimension_numbers<[1], [0], [0], [1], [0, 0, 1, 1], [], []>} : vector<16x32xf32>, vector<32x32xf32>, vector<16x32xf32> -> vector<16x32xf32>
    %13 = arith.addf %11, %12 : vector<16x32xf32>
    %14 = math.tanh %13 : vector<16x32xf32>
    %15 = vector.extract_strided_slice %7 {offsets = [1, 0, 0], sizes = [1, 16, 32], strides = [1, 1, 1]} : vector<8x16x32xf32> to vector<1x16x32xf32>
    %16 = vector.shape_cast %15 : vector<1x16x32xf32> to vector<16x32xf32>
    %cst_10 = arith.constant dense<0.000000e+00> : vector<16x32xf32>
    %17 = tpu.matmul %14, %8, %cst_10 {dimension_numbers = #tpu.dot_dimension_numbers<[1], [0], [0], [1], [0, 0, 1, 1], [], []>} : vector<16x32xf32>, vector<32x32xf32>, vector<16x32xf32> -> vector<16x32xf32>
    %18 = arith.addf %16, %17 : vector<16x32xf32>
    %19 = math.tanh %18 : vector<16x32xf32>
    %20 = vector.extract_strided_slice %7 {offsets = [2, 0, 0], sizes = [1, 16, 32], strides = [1, 1, 1]} : vector<8x16x32xf32> to vector<1x16x32xf32>
    %21 = vector.shape_cast %20 : vector<1x16x32xf32> to vector<16x32xf32>
    %cst_11 = arith.constant dense<0.000000e+00> : vector<16x32xf32>
    %22 = tpu.matmul %19, %8, %cst_11 {dimension_numbers = #tpu.dot_dimension_numbers<[1], [0], [0], [1], [0, 0, 1, 1], [], []>} : vector<16x32xf32>, vector<32x32xf32>, vector<16x32xf32> -> vector<16x32xf32>
    %23 = arith.addf %21, %22 : vector<16x32xf32>
    %24 = math.tanh %23 : vector<16x32xf32>
    %25 = vector.extract_strided_slice %7 {offsets = [3, 0, 0], sizes = [1, 16, 32], strides = [1, 1, 1]} : vector<8x16x32xf32> to vector<1x16x32xf32>
    %26 = vector.shape_cast %25 : vector<1x16x32xf32> to vector<16x32xf32>
    %cst_12 = arith.constant dense<0.000000e+00> : vector<16x32xf32>
    %27 = tpu.matmul %24, %8, %cst_12 {dimension_numbers = #tpu.dot_dimension_numbers<[1], [0], [0], [1], [0, 0, 1, 1], [], []>} : vector<16x32xf32>, vector<32x32xf32>, vector<16x32xf32> -> vector<16x32xf32>
    %28 = arith.addf %26, %27 : vector<16x32xf32>
    %29 = math.tanh %28 : vector<16x32xf32>
    %30 = vector.extract_strided_slice %7 {offsets = [4, 0, 0], sizes = [1, 16, 32], strides = [1, 1, 1]} : vector<8x16x32xf32> to vector<1x16x32xf32>
    %31 = vector.shape_cast %30 : vector<1x16x32xf32> to vector<16x32xf32>
    %cst_13 = arith.constant dense<0.000000e+00> : vector<16x32xf32>
    %32 = tpu.matmul %29, %8, %cst_13 {dimension_numbers = #tpu.dot_dimension_numbers<[1], [0], [0], [1], [0, 0, 1, 1], [], []>} : vector<16x32xf32>, vector<32x32xf32>, vector<16x32xf32> -> vector<16x32xf32>
    %33 = arith.addf %31, %32 : vector<16x32xf32>
    %34 = math.tanh %33 : vector<16x32xf32>
    %35 = vector.extract_strided_slice %7 {offsets = [5, 0, 0], sizes = [1, 16, 32], strides = [1, 1, 1]} : vector<8x16x32xf32> to vector<1x16x32xf32>
    %36 = vector.shape_cast %35 : vector<1x16x32xf32> to vector<16x32xf32>
    %cst_14 = arith.constant dense<0.000000e+00> : vector<16x32xf32>
    %37 = tpu.matmul %34, %8, %cst_14 {dimension_numbers = #tpu.dot_dimension_numbers<[1], [0], [0], [1], [0, 0, 1, 1], [], []>} : vector<16x32xf32>, vector<32x32xf32>, vector<16x32xf32> -> vector<16x32xf32>
    %38 = arith.addf %36, %37 : vector<16x32xf32>
    %39 = math.tanh %38 : vector<16x32xf32>
    %40 = vector.extract_strided_slice %7 {offsets = [6, 0, 0], sizes = [1, 16, 32], strides = [1, 1, 1]} : vector<8x16x32xf32> to vector<1x16x32xf32>
    %41 = vector.shape_cast %40 : vector<1x16x32xf32> to vector<16x32xf32>
    %cst_15 = arith.constant dense<0.000000e+00> : vector<16x32xf32>
    %42 = tpu.matmul %39, %8, %cst_15 {dimension_numbers = #tpu.dot_dimension_numbers<[1], [0], [0], [1], [0, 0, 1, 1], [], []>} : vector<16x32xf32>, vector<32x32xf32>, vector<16x32xf32> -> vector<16x32xf32>
    %43 = arith.addf %41, %42 : vector<16x32xf32>
    %44 = math.tanh %43 : vector<16x32xf32>
    %45 = vector.extract_strided_slice %7 {offsets = [7, 0, 0], sizes = [1, 16, 32], strides = [1, 1, 1]} : vector<8x16x32xf32> to vector<1x16x32xf32>
    %46 = vector.shape_cast %45 : vector<1x16x32xf32> to vector<16x32xf32>
    %cst_16 = arith.constant dense<0.000000e+00> : vector<16x32xf32>
    %47 = tpu.matmul %44, %8, %cst_16 {dimension_numbers = #tpu.dot_dimension_numbers<[1], [0], [0], [1], [0, 0, 1, 1], [], []>} : vector<16x32xf32>, vector<32x32xf32>, vector<16x32xf32> -> vector<16x32xf32>
    %48 = arith.addf %46, %47 : vector<16x32xf32>
    %49 = math.tanh %48 : vector<16x32xf32>
    %c0_17 = arith.constant 0 : index
    %c0_18 = arith.constant 0 : index
    %50 = vector.load %arg5[%c0_17, %c0_18] : memref<32x32xf32, #tpu.memory_space<vmem>>, vector<32x32xf32>
    %cst_19 = arith.constant dense<0.000000e+00> : vector<16x32xf32>
    %51 = tpu.matmul %49, %50, %cst_19 {dimension_numbers = #tpu.dot_dimension_numbers<[1], [0], [0], [1], [0, 0, 1, 1], [], []>} : vector<16x32xf32>, vector<32x32xf32>, vector<16x32xf32> -> vector<16x32xf32>
    %c0_20 = arith.constant 0 : index
    %c0_21 = arith.constant 0 : index
    %52 = vector.load %arg6[%c0_20, %c0_21] : memref<1x32xf32, #tpu.memory_space<vmem>>, vector<1x32xf32>
    %53 = vector.broadcast %52 : vector<1x32xf32> to vector<16x32xf32>
    %54 = arith.addf %51, %53 : vector<16x32xf32>
    %cst_22 = arith.constant 0.000000e+00 : f32
    %55 = vector.broadcast %cst_22 : f32 to vector<16x32xf32>
    %56 = arith.maximumf %54, %55 : vector<16x32xf32>
    %c0_23 = arith.constant 0 : index
    %c0_24 = arith.constant 0 : index
    %57 = vector.load %arg7[%c0_23, %c0_24] : memref<32x128xf32, #tpu.memory_space<vmem>>, vector<32x128xf32>
    %cst_25 = arith.constant dense<0.000000e+00> : vector<16x128xf32>
    %58 = tpu.matmul %56, %57, %cst_25 {dimension_numbers = #tpu.dot_dimension_numbers<[1], [0], [0], [1], [0, 0, 1, 1], [], []>} : vector<16x32xf32>, vector<32x128xf32>, vector<16x128xf32> -> vector<16x128xf32>
    %c0_26 = arith.constant 0 : index
    %c0_27 = arith.constant 0 : index
    %59 = vector.load %arg8[%c0_26, %c0_27] : memref<1x128xf32, #tpu.memory_space<vmem>>, vector<1x128xf32>
    %60 = vector.broadcast %59 : vector<1x128xf32> to vector<16x128xf32>
    %61 = arith.addf %58, %60 : vector<16x128xf32>
    %c0_28 = arith.constant 0 : index
    %c0_29 = arith.constant 0 : index
    %62 = vector.load %arg9[%c0_28, %c0_29] : memref<16x128xf32, #tpu.memory_space<vmem>>, vector<16x128xf32>
    tpu.vector_store %arg9[%c0_28, %c0_29], %61 {strides = array<i32>} : memref<16x128xf32, #tpu.memory_space<vmem>>, vector<16x128xf32>,
    return
  }
  func.func @transform_0(%arg0: i32) -> (i32, i32, i32) {
    %c0_i32 = arith.constant 0 : i32
    %c0_i32_0 = arith.constant 0 : i32
    %c0_i32_1 = arith.constant 0 : i32
    return %c0_i32, %arg0, %c0_i32_0 : i32, i32, i32
  }
  func.func @transform_1(%arg0: i32) -> (i32, i32) {
    %c0_i32 = arith.constant 0 : i32
    %c0_i32_0 = arith.constant 0 : i32
    %c0_i32_1 = arith.constant 0 : i32
    return %c0_i32, %c0_i32_0 : i32, i32
  }
  func.func @transform_2(%arg0: i32) -> (i32, i32) {
    %c0_i32 = arith.constant 0 : i32
    %c0_i32_0 = arith.constant 0 : i32
    %c0_i32_1 = arith.constant 0 : i32
    return %c0_i32, %c0_i32_0 : i32, i32
  }
  func.func @transform_3(%arg0: i32) -> (i32, i32) {
    %c0_i32 = arith.constant 0 : i32
    %c0_i32_0 = arith.constant 0 : i32
    %c0_i32_1 = arith.constant 0 : i32
    return %c0_i32, %c0_i32_0 : i32, i32
  }
  func.func @transform_4(%arg0: i32) -> (i32, i32) {
    %c0_i32 = arith.constant 0 : i32
    %c0_i32_0 = arith.constant 0 : i32
    %c0_i32_1 = arith.constant 0 : i32
    return %c0_i32, %c0_i32_0 : i32, i32
  }
  func.func @transform_5(%arg0: i32) -> (i32, i32) {
    %c0_i32 = arith.constant 0 : i32
    %c0_i32_0 = arith.constant 0 : i32
    %c0_i32_1 = arith.constant 0 : i32
    return %c0_i32, %c0_i32_0 : i32, i32
  }
  func.func @transform_6(%arg0: i32) -> (i32, i32) {
    %c0_i32 = arith.constant 0 : i32
    %c0_i32_0 = arith.constant 0 : i32
    %c0_i32_1 = arith.constant 0 : i32
    return %c0_i32, %c0_i32_0 : i32, i32
  }
  func.func @transform_7(%arg0: i32) -> (i32, i32) {
    %c0_i32 = arith.constant 0 : i32
    %c0_i32_0 = arith.constant 0 : i32
    %c0_i32_1 = arith.constant 0 : i32
    return %c0_i32, %c0_i32_0 : i32, i32
  }
  func.func @transform_8(%arg0: i32) -> (i32, i32) {
    %c0_i32 = arith.constant 0 : i32
    %c0_i32_0 = arith.constant 0 : i32
    return %arg0, %c0_i32 : i32, i32
  }
}

</mosaic_0001>

<llo_original>
// kernel: tpu_custom_call.1
$region0: #{tpu_custom_call.1}
  #allocation0 [shape = 'u32[]', space=smem, size = 0x4, offset = 0x4, fixed_abs, tag = 'smem constant byte address 0x4 - core index']
  #allocation1 [shape = 'u32[144,128]{1,0:T(1,128)}', space=vmem, size = 0x12000, scoped, tag = 'internal scratch']
  %s0 = inlined_call_operand.hbm [shape: f32[8,16,32], index: 0, kind: input, shape index: {}]
  %s1 = inlined_call_operand.hbm [shape: f32[32,32], index: 1, kind: input, shape index: {}]
  %s2 = inlined_call_operand.hbm [shape: f32[32,32], index: 2, kind: input, shape index: {}]
  %s3 = inlined_call_operand.vmem [shape: f32[1,32], index: 3, kind: input, shape index: {}]
  %s4 = inlined_call_operand.hbm [shape: f32[32,32], index: 4, kind: input, shape index: {}]
  %s5 = inlined_call_operand.vmem [shape: f32[1,32], index: 5, kind: input, shape index: {}]
  %s6 = inlined_call_operand.hbm [shape: f32[32,128], index: 6, kind: input, shape index: {}]
  %s7 = inlined_call_operand.vmem [shape: f32[1,128], index: 7, kind: input, shape index: {}]
  %s8 = inlined_call_operand.hbm [shape: f32[16,128], index: 8, kind: output, shape index: {}]
  %s9 = sld [smem:[#allocation0]]
  $region62: #{tpu_custom_call.1} parent=0
    _
  %s11 = ssub.s32 1, %s9
  %s12 = scalar_select 0, %s11, %s9
  $region1: #{tpu_custom_call.1} parent=0
    #allocation2 [shape = 'u8[65536]{0}', space=vmem, size = 0x10000, scoped, tag = 'input window, operand 0, single buffered']
    #allocation3 [shape = 's32[1]{0}', space=sflag, size = 0x4, scoped, tag = 'scoped memory for tpu_custom_call.1']
    #allocation4 [shape = 's32[1]{0}', space=sflag, size = 0x4, scoped, tag = 'scoped memory for tpu_custom_call.1']
    #allocation5 [shape = 'u8[16384]{0}', space=vmem, size = 0x4000, scoped, tag = 'input window, operand 1, single buffered']
    #allocation6 [shape = 's32[1]{0}', space=sflag, size = 0x4, scoped, tag = 'scoped memory for tpu_custom_call.1']
    #allocation7 [shape = 'u8[16384]{0}', space=vmem, size = 0x4000, scoped, tag = 'input window, operand 2, single buffered']
    #allocation8 [shape = 'u8[16384]{0}', space=vmem, size = 0x4000, scoped, tag = 'input window, operand 4, single buffered']
    #allocation9 [shape = 's32[1]{0}', space=sflag, size = 0x4, scoped, tag = 'scoped memory for tpu_custom_call.1']
    #allocation10 [shape = 'u8[16384]{0}', space=vmem, size = 0x4000, scoped, tag = 'input window, operand 6, single buffered']
    #allocation11 [shape = 'u8[8192]{0}', space=vmem, size = 0x2000, scoped, tag = 'output window, operand 0, single buffered']
    %13 = vsyncpa [#allocation3], 0
    %14 = vsyncpa [#allocation6], 0
    %15 = vsyncpa [#allocation9], 0
    %16 = vsyncpa [#allocation4], 0
    // Predicated region
    $region2: #{tpu_custom_call.1} parent=1 // pred_check
      _
    $region3: #{tpu_custom_call.1} parent=1 // pred_check_branch
      %18 = sbr.rel (0) target = $region5
    $region4: #{tpu_custom_call.1} parent=1 // pred_region
      %s20 = ssub.s32 2048, 2048
      %21 = vsyncadd [#allocation3], %s20
      %s22 = sshll.u32 [#allocation2], 4
      %s23 = int_to_ptr.vmem [resolvable:$true] %s22
      %28 = dma.hbm_to_vmem [thread:$0]  %s0, 2048, %s23, [#allocation3], 128, 128, 8
    $region5: #{tpu_custom_call.1} parent=1 // pred_fallthru
      _
    // Predicated region
    $region6: #{tpu_custom_call.1} parent=1 // pred_check
      _
    $region7: #{tpu_custom_call.1} parent=1 // pred_check_branch
      %30 = sbr.rel (0) target = $region9
    $region8: #{tpu_custom_call.1} parent=1 // pred_region
      %s32 = ssub.s32 512, 512
      %33 = vsyncadd [#allocation6], %s32
      %s34 = sshll.u32 [#allocation5], 4
      %s35 = int_to_ptr.vmem [resolvable:$true] %s34
      %40 = dma.hbm_to_vmem [thread:$0]  %s1, 512, %s35, [#allocation6], 128, 128, 8
    $region9: #{tpu_custom_call.1} parent=1 // pred_fallthru
      _
    // Predicated region
    $region10: #{tpu_custom_call.1} parent=1 // pred_check
      _
    $region11: #{tpu_custom_call.1} parent=1 // pred_check_branch
      %42 = sbr.rel (0) target = $region13
    $region12: #{tpu_custom_call.1} parent=1 // pred_region
      %s44 = ssub.s32 512, 512
      %45 = vsyncadd [#allocation6], %s44
      %s46 = sshll.u32 [#allocation7], 4
      %s47 = int_to_ptr.vmem [resolvable:$true] %s46
      %52 = dma.hbm_to_vmem [thread:$0]  %s2, 512, %s47, [#allocation6], 128, 128, 8
    $region13: #{tpu_custom_call.1} parent=1 // pred_fallthru
      _
    // Predicated region
    $region14: #{tpu_custom_call.1} parent=1 // pred_check
      _
    $region15: #{tpu_custom_call.1} parent=1 // pred_check_branch
      %54 = sbr.rel (0) target = $region17
    $region16: #{tpu_custom_call.1} parent=1 // pred_region
      _
    $region17: #{tpu_custom_call.1} parent=1 // pred_fallthru
      _
    // Predicated region
    $region18: #{tpu_custom_call.1} parent=1 // pred_check
      _
    $region19: #{tpu_custom_call.1} parent=1 // pred_check_branch
      %56 = sbr.rel (0) target = $region21
    $region20: #{tpu_custom_call.1} parent=1 // pred_region
      %s58 = ssub.s32 512, 512
      %59 = vsyncadd [#allocation9], %s58
      %s60 = sshll.u32 [#allocation8], 4
      %s61 = int_to_ptr.vmem [resolvable:$true] %s60
      %66 = dma.hbm_to_vmem [thread:$0]  %s4, 512, %s61, [#allocation9], 128, 128, 8
    $region21: #{tpu_custom_call.1} parent=1 // pred_fallthru
      _
    // Predicated region
    $region22: #{tpu_custom_call.1} parent=1 // pred_check
      _
    $region23: #{tpu_custom_call.1} parent=1 // pred_check_branch
      %68 = sbr.rel (0) target = $region25
    $region24: #{tpu_custom_call.1} parent=1 // pred_region
      _
    $region25: #{tpu_custom_call.1} parent=1 // pred_fallthru
      _
    // Predicated region
    $region26: #{tpu_custom_call.1} parent=1 // pred_check
      _
    $region27: #{tpu_custom_call.1} parent=1 // pred_check_branch
      %70 = sbr.rel (0) target = $region29
    $region28: #{tpu_custom_call.1} parent=1 // pred_region
      %s72 = ssub.s32 512, 512
      %73 = vsyncadd [#allocation9], %s72
      %s74 = sshll.u32 [#allocation10], 4
      %s75 = int_to_ptr.vmem [resolvable:$true] %s74
      %80 = dma.hbm_to_vmem [thread:$0]  %s6, 512, %s75, [#allocation9], 128, 128, 8
    $region29: #{tpu_custom_call.1} parent=1 // pred_fallthru
      _
    // Predicated region
    $region30: #{tpu_custom_call.1} parent=1 // pred_check
      _
    $region31: #{tpu_custom_call.1} parent=1 // pred_check_branch
      %82 = sbr.rel (0) target = $region33
    $region32: #{tpu_custom_call.1} parent=1 // pred_region
      _
    $region33: #{tpu_custom_call.1} parent=1 // pred_fallthru
      _
    // Predicated region
    $region34: #{tpu_custom_call.1} parent=1 // pred_check
      _
    $region35: #{tpu_custom_call.1} parent=1 // pred_check_branch
      %84 = sbr.rel (0) target = $region37
    $region36: #{tpu_custom_call.1} parent=1 // pred_region
      %85 = dma.done [#allocation3], 2048
    $region37: #{tpu_custom_call.1} parent=1 // pred_fallthru
      _
    // Predicated region
    $region38: #{tpu_custom_call.1} parent=1 // pred_check
      _
    $region39: #{tpu_custom_call.1} parent=1 // pred_check_branch
      %87 = sbr.rel (0) target = $region41
    $region40: #{tpu_custom_call.1} parent=1 // pred_region
      %88 = dma.done [#allocation6], 512
    $region41: #{tpu_custom_call.1} parent=1 // pred_fallthru
      _
    // Predicated region
    $region42: #{tpu_custom_call.1} parent=1 // pred_check
      _
    $region43: #{tpu_custom_call.1} parent=1 // pred_check_branch
      %90 = sbr.rel (0) target = $region45
    $region44: #{tpu_custom_call.1} parent=1 // pred_region
      %91 = dma.done [#allocation6], 512
    $region45: #{tpu_custom_call.1} parent=1 // pred_fallthru
      _
    // Predicated region
    $region46: #{tpu_custom_call.1} parent=1 // pred_check
      _
    $region47: #{tpu_custom_call.1} parent=1 // pred_check_branch
      %93 = sbr.rel (0) target = $region49
    $region48: #{tpu_custom_call.1} parent=1 // pred_region
      %94 = dma.done [#allocation9], 512
    $region49: #{tpu_custom_call.1} parent=1 // pred_fallthru
      _
    // Predicated region
    $region50: #{tpu_custom_call.1} parent=1 // pred_check
      _
    $region51: #{tpu_custom_call.1} parent=1 // pred_check_branch
      %96 = sbr.rel (0) target = $region53
    $region52: #{tpu_custom_call.1} parent=1 // pred_region
      %97 = dma.done [#allocation9], 512
    $region53: #{tpu_custom_call.1} parent=1 // pred_fallthru
      _
    %v98 = vld [vmem:[#allocation2] sm:$0xff]
    %v99 = vld [vmem:[#allocation2 + $0x8] sm:$0xff]
    %v100 = vld [vmem:[#allocation2 + $0x10] sm:$0xff]
    %v101 = vld [vmem:[#allocation2 + $0x18] sm:$0xff]
    %v102 = vld [vmem:[#allocation2 + $0x20] sm:$0xff]
    %v103 = vld [vmem:[#allocation2 + $0x28] sm:$0xff]
    %v104 = vld [vmem:[#allocation2 + $0x30] sm:$0xff]
    %v105 = vld [vmem:[#allocation2 + $0x38] sm:$0xff]
    %v106 = vld [vmem:[#allocation2 + $0x40] sm:$0xff]
    %v107 = vld [vmem:[#allocation2 + $0x48] sm:$0xff]
    %v108 = vld [vmem:[#allocation2 + $0x50] sm:$0xff]
    %v109 = vld [vmem:[#allocation2 + $0x58] sm:$0xff]
    %v110 = vld [vmem:[#allocation2 + $0x60] sm:$0xff]
    %v111 = vld [vmem:[#allocation2 + $0x68] sm:$0xff]
    %v112 = vld [vmem:[#allocation2 + $0x70] sm:$0xff]
    %v113 = vld [vmem:[#allocation2 + $0x78] sm:$0xff]
    %v114 = vld [vmem:[#allocation5] sm:$0xff]
    %v115 = vld [vmem:[#allocation5 + $0x8] sm:$0xff]
    %v116 = vld [vmem:[#allocation5 + $0x10] sm:$0xff]
    %v117 = vld [vmem:[#allocation5 + $0x18] sm:$0xff]
    %v118 = vld [vmem:[%s3] sm:$0x1]
    %v120 = vlaneseq
    %v121 = vshrl.u32 %v120, 7
    %v122 = vsub.s32 0, %v121
    %v123 = vrot.slane %v118, %v122
    %vm125 = vcmask 261120
    %v127 = vsel %vm125, %v98, 0
    %v130 = vsel %vm125, %v99, 0
    %v133 = vsel %vm125, %v100, 0
    %v136 = vsel %vm125, %v101, 0
    %v139 = vsel %vm125, %v102, 0
    %v142 = vsel %vm125, %v103, 0
    %v145 = vsel %vm125, %v104, 0
    %v148 = vsel %vm125, %v105, 0
    %v151 = vsel %vm125, %v106, 0
    %v154 = vsel %vm125, %v107, 0
    %v157 = vsel %vm125, %v108, 0
    %v160 = vsel %vm125, %v109, 0
    %v163 = vsel %vm125, %v110, 0
    %v166 = vsel %vm125, %v111, 0
    %v169 = vsel %vm125, %v112, 0
    %v172 = vsel %vm125, %v113, 0
    %174 = vmatprep.subr.mxu0 0.0
    %175 = vmatpush1.msra.mxu0 0.0
    %176 = vmatprep.subr.mxu0 0.0
    %177 = vmatpush1.msra.mxu0 0.0
    %178 = vmatprep.subr.mxu0 0.0
    %179 = vmatpush1.msra.mxu0 0.0
    %180 = vmatprep.subr.mxu0 0.0
    %181 = vmatpush1.msra.mxu0 0.0
    %182 = vmatprep.subr.mxu0 0.0
    %183 = vmatpush1.msra.mxu0 0.0
    %184 = vmatprep.subr.mxu0 0.0
    %185 = vmatpush1.msra.mxu0 0.0
    %186 = vmatprep.subr.mxu0 0.0
    %187 = vmatpush1.msra.mxu0 0.0
    %188 = vmatprep.subr.mxu0 0.0
    %189 = vmatpush1.msra.mxu0 0.0
    %190 = vmatprep.subr.mxu0 0.0
    %191 = vmatpush1.msra.mxu0 0.0
    %192 = vmatprep.subr.mxu0 0.0
    %193 = vmatpush1.msra.mxu0 0.0
    %194 = vmatprep.subr.mxu0 0.0
    %195 = vmatpush1.msra.mxu0 0.0
    %196 = vmatprep.subr.mxu0 0.0
    %197 = vmatpush1.msra.mxu0 0.0
    %198 = vmatprep.subr.mxu0 0.0
    %199 = vmatpush1.msra.mxu0 %v117
    %200 = vmatprep.subr.mxu0 0.0
    %201 = vmatpush1.msra.mxu0 %v116
    %202 = vmatprep.subr.mxu0 0.0
    %203 = vmatpush1.msra.mxu0 %v115
    %204 = vmatprep.subr.mxu0 0.0
    %205 = vmatpush1.msra.mxu0 %v114
    %206 = vmatprep.subr.mxu0 0.0
    %207 = vmatpush2.msra.mxu0 0.0
    %208 = vmatprep.subr.mxu0 0.0
    %209 = vmatpush2.msra.mxu0 0.0
    %210 = vmatprep.subr.mxu0 0.0
    %211 = vmatpush2.msra.mxu0 0.0
    %212 = vmatprep.subr.mxu0 0.0
    %213 = vmatpush2.msra.mxu0 0.0
    %214 = vmatprep.subr.mxu0 0.0
    %215 = vmatpush2.msra.mxu0 0.0
    %216 = vmatprep.subr.mxu0 0.0
    %217 = vmatpush2.msra.mxu0 0.0
    %218 = vmatprep.subr.mxu0 0.0
    %219 = vmatpush2.msra.mxu0 0.0
    %220 = vmatprep.subr.mxu0 0.0
    %221 = vmatpush2.msra.mxu0 0.0
    %222 = vmatprep.subr.mxu0 0.0
    %223 = vmatpush2.msra.mxu0 0.0
    %224 = vmatprep.subr.mxu0 0.0
    %225 = vmatpush2.msra.mxu0 0.0
    %226 = vmatprep.subr.mxu0 0.0
    %227 = vmatpush2.msra.mxu0 0.0
    %228 = vmatprep.subr.mxu0 0.0
    %229 = vmatpush2.msra.mxu0 0.0
    %230 = vmatprep.subr.mxu0 0.0
    %231 = vmatpush2.msra.mxu0 0.0
    %232 = vmatprep.subr.mxu0 0.0
    %233 = vmatpush2.msra.mxu0 0.0
    %234 = vmatprep.subr.mxu0 0.0
    %235 = vmatpush2.msra.mxu0 0.0
    %236 = vmatprep.subr.mxu0 0.0
    %237 = vmatpush2.msra.mxu0 0.0
    %238 = vmatprep.mubr.f32.mxu0 0.0
    %239 = vmatmul.mubr.f32.gmra.mxu0 %v127
    %v240 = vpop.f32.mrf.mxu0
    %v241 = vadd.f32 %v123, %v240
    %v242 = vpop.f32.mrf.mxu0
    %243 = vmatprep.mubr.f32.mxu0 0.0
    %244 = vmatmul.mubr.f32.gmra.mxu0 %v130
    %v245 = vpop.f32.mrf.mxu0
    %v246 = vadd.f32 %v123, %v245
    %v247 = vpop.f32.mrf.mxu0
    %248 = vmatprep.mubr.f32.mxu0 0.0
    %249 = vmatmul.mubr.f32.gmra.mxu0 %v133
    %v250 = vpop.f32.mrf.mxu0
    %v251 = vadd.f32 %v123, %v250
    %v252 = vpop.f32.mrf.mxu0
    %253 = vmatprep.mubr.f32.mxu0 0.0
    %254 = vmatmul.mubr.f32.gmra.mxu0 %v136
    %v255 = vpop.f32.mrf.mxu0
    %v256 = vadd.f32 %v123, %v255
    %v257 = vpop.f32.mrf.mxu0
    %258 = vmatprep.mubr.f32.mxu0 0.0
    %259 = vmatmul.mubr.f32.gmra.mxu0 %v139
    %v260 = vpop.f32.mrf.mxu0
    %v261 = vadd.f32 %v123, %v260
    %v262 = vpop.f32.mrf.mxu0
    %263 = vmatprep.mubr.f32.mxu0 0.0
    %264 = vmatmul.mubr.f32.gmra.mxu0 %v142
    %v265 = vpop.f32.mrf.mxu0
    %v266 = vadd.f32 %v123, %v265
    %v267 = vpop.f32.mrf.mxu0
    %268 = vmatprep.mubr.f32.mxu0 0.0
    %269 = vmatmul.mubr.f32.gmra.mxu0 %v145
    %v270 = vpop.f32.mrf.mxu0
    %v271 = vadd.f32 %v123, %v270
    %v272 = vpop.f32.mrf.mxu0
    %273 = vmatprep.mubr.f32.mxu0 0.0
    %274 = vmatmul.mubr.f32.gmra.mxu0 %v148
    %v275 = vpop.f32.mrf.mxu0
    %v276 = vadd.f32 %v123, %v275
    %v277 = vpop.f32.mrf.mxu0
    %278 = vmatprep.mubr.f32.mxu0 0.0
    %279 = vmatmul.mubr.f32.gmra.mxu0 %v151
    %v280 = vpop.f32.mrf.mxu0
    %v281 = vadd.f32 %v123, %v280
    %v282 = vpop.f32.mrf.mxu0
    %283 = vmatprep.mubr.f32.mxu0 0.0
    %284 = vmatmul.mubr.f32.gmra.mxu0 %v154
    %v285 = vpop.f32.mrf.mxu0
    %v286 = vadd.f32 %v123, %v285
    %v287 = vpop.f32.mrf.mxu0
    %288 = vmatprep.mubr.f32.mxu0 0.0
    %289 = vmatmul.mubr.f32.gmra.mxu0 %v157
    %v290 = vpop.f32.mrf.mxu0
    %v291 = vadd.f32 %v123, %v290
    %v292 = vpop.f32.mrf.mxu0
    %293 = vmatprep.mubr.f32.mxu0 0.0
    %294 = vmatmul.mubr.f32.gmra.mxu0 %v160
    %v295 = vpop.f32.mrf.mxu0
    %v296 = vadd.f32 %v123, %v295
    %v297 = vpop.f32.mrf.mxu0
    %298 = vmatprep.mubr.f32.mxu0 0.0
    %299 = vmatmul.mubr.f32.gmra.mxu0 %v163
    %v300 = vpop.f32.mrf.mxu0
    %v301 = vadd.f32 %v123, %v300
    %v302 = vpop.f32.mrf.mxu0
    %303 = vmatprep.mubr.f32.mxu0 0.0
    %304 = vmatmul.mubr.f32.gmra.mxu0 %v166
    %v305 = vpop.f32.mrf.mxu0
    %v306 = vadd.f32 %v123, %v305
    %v307 = vpop.f32.mrf.mxu0
    %308 = vmatprep.mubr.f32.mxu0 0.0
    %309 = vmatmul.mubr.f32.gmra.mxu0 %v169
    %v310 = vpop.f32.mrf.mxu0
    %v311 = vadd.f32 %v123, %v310
    %v312 = vpop.f32.mrf.mxu0
    %313 = vmatprep.mubr.f32.mxu0 0.0
    %314 = vmatmul.mubr.f32.gmra.mxu0 %v172
    %v315 = vpop.f32.mrf.mxu0
    %v316 = vadd.f32 %v123, %v315
    %v317 = vpop.f32.mrf.mxu0
    %318 = vdwg.mxu0
    %v319 = vld [vmem:[#allocation7] sm:$0xff]
    %v320 = vld [vmem:[#allocation7 + $0x8] sm:$0xff]
    %v321 = vld [vmem:[#allocation7 + $0x10] sm:$0xff]
    %v322 = vld [vmem:[#allocation7 + $0x18] sm:$0xff]
    %v324 = vsel %vm125, 0.0, 0
    %326 = vmatprep.subr.mxu0 0.0
    %327 = vmatpush1.msra.mxu0 0.0
    %328 = vmatprep.subr.mxu0 0.0
    %329 = vmatpush1.msra.mxu0 0.0
    %330 = vmatprep.subr.mxu0 0.0
    %331 = vmatpush1.msra.mxu0 0.0
    %332 = vmatprep.subr.mxu0 0.0
    %333 = vmatpush1.msra.mxu0 0.0
    %334 = vmatprep.subr.mxu0 0.0
    %335 = vmatpush1.msra.mxu0 0.0
    %336 = vmatprep.subr.mxu0 0.0
    %337 = vmatpush1.msra.mxu0 0.0
    %338 = vmatprep.subr.mxu0 0.0
    %339 = vmatpush1.msra.mxu0 0.0
    %340 = vmatprep.subr.mxu0 0.0
    %341 = vmatpush1.msra.mxu0 0.0
    %342 = vmatprep.subr.mxu0 0.0
    %343 = vmatpush1.msra.mxu0 0.0
    %344 = vmatprep.subr.mxu0 0.0
    %345 = vmatpush1.msra.mxu0 0.0
    %346 = vmatprep.subr.mxu0 0.0
    %347 = vmatpush1.msra.mxu0 0.0
    %348 = vmatprep.subr.mxu0 0.0
    %349 = vmatpush1.msra.mxu0 0.0
    %350 = vmatprep.subr.mxu0 0.0
    %351 = vmatpush1.msra.mxu0 %v322
    %352 = vmatprep.subr.mxu0 0.0
    %353 = vmatpush1.msra.mxu0 %v321
    %354 = vmatprep.subr.mxu0 0.0
    %355 = vmatpush1.msra.mxu0 %v320
    %356 = vmatprep.subr.mxu0 0.0
    %357 = vmatpush1.msra.mxu0 %v319
    %358 = vmatprep.subr.mxu0 0.0
    %359 = vmatpush2.msra.mxu0 0.0
    %360 = vmatprep.subr.mxu0 0.0
    %361 = vmatpush2.msra.mxu0 0.0
    %362 = vmatprep.subr.mxu0 0.0
    %363 = vmatpush2.msra.mxu0 0.0
    %364 = vmatprep.subr.mxu0 0.0
    %365 = vmatpush2.msra.mxu0 0.0
    %366 = vmatprep.subr.mxu0 0.0
    %367 = vmatpush2.msra.mxu0 0.0
    %368 = vmatprep.subr.mxu0 0.0
    %369 = vmatpush2.msra.mxu0 0.0
    %370 = vmatprep.subr.mxu0 0.0
    %371 = vmatpush2.msra.mxu0 0.0
    %372 = vmatprep.subr.mxu0 0.0
    %373 = vmatpush2.msra.mxu0 0.0
    %374 = vmatprep.subr.mxu0 0.0
    %375 = vmatpush2.msra.mxu0 0.0
    %376 = vmatprep.subr.mxu0 0.0
    %377 = vmatpush2.msra.mxu0 0.0
    %378 = vmatprep.subr.mxu0 0.0
    %379 = vmatpush2.msra.mxu0 0.0
    %380 = vmatprep.subr.mxu0 0.0
    %381 = vmatpush2.msra.mxu0 0.0
    %382 = vmatprep.subr.mxu0 0.0
    %383 = vmatpush2.msra.mxu0 0.0
    %384 = vmatprep.subr.mxu0 0.0
    %385 = vmatpush2.msra.mxu0 0.0
    %386 = vmatprep.subr.mxu0 0.0
    %387 = vmatpush2.msra.mxu0 0.0
    %388 = vmatprep.subr.mxu0 0.0
    %389 = vmatpush2.msra.mxu0 0.0
    %390 = vmatprep.mubr.f32.mxu0 0.0
    %391 = vmatmul.mubr.f32.gmra.mxu0 %v324
    %v392 = vpop.f32.mrf.mxu0
    %v393 = vadd.f32 0.0, %v392
    %v394 = vpop.f32.mrf.mxu0
    %395 = vmatprep.mubr.f32.mxu0 0.0
    %396 = vmatmul.mubr.f32.gmra.mxu0 %v324
    %v397 = vpop.f32.mrf.mxu0
    %v398 = vadd.f32 0.0, %v397
    %v399 = vpop.f32.mrf.mxu0
    %400 = vdwg.mxu0
    %v401 = vadd.f32 %v241, %v393
    %v402 = vadd.f32 %v246, %v398
    %v403 = vtanh.pop %v401
    %v404 = vtanh.pop %v402
    %v406 = vsel %vm125, %v403, 0
    %v409 = vsel %vm125, %v404, 0
    %411 = vmatprep.subr.mxu0 0.0
    %412 = vmatpush1.msra.mxu0 0.0
    %413 = vmatprep.subr.mxu0 0.0
    %414 = vmatpush1.msra.mxu0 0.0
    %415 = vmatprep.subr.mxu0 0.0
    %416 = vmatpush1.msra.mxu0 0.0
    %417 = vmatprep.subr.mxu0 0.0
    %418 = vmatpush1.msra.mxu0 0.0
    %419 = vmatprep.subr.mxu0 0.0
    %420 = vmatpush1.msra.mxu0 0.0
    %421 = vmatprep.subr.mxu0 0.0
    %422 = vmatpush1.msra.mxu0 0.0
    %423 = vmatprep.subr.mxu0 0.0
    %424 = vmatpush1.msra.mxu0 0.0
    %425 = vmatprep.subr.mxu0 0.0
    %426 = vmatpush1.msra.mxu0 0.0
    %427 = vmatprep.subr.mxu0 0.0
    %428 = vmatpush1.msra.mxu0 0.0
    %429 = vmatprep.subr.mxu0 0.0
    %430 = vmatpush1.msra.mxu0 0.0
    %431 = vmatprep.subr.mxu0 0.0
    %432 = vmatpush1.msra.mxu0 0.0
    %433 = vmatprep.subr.mxu0 0.0
    %434 = vmatpush1.msra.mxu0 0.0
    %435 = vmatprep.subr.mxu0 0.0
    %436 = vmatpush1.msra.mxu0 %v322
    %437 = vmatprep.subr.mxu0 0.0
    %438 = vmatpush1.msra.mxu0 %v321
    %439 = vmatprep.subr.mxu0 0.0
    %440 = vmatpush1.msra.mxu0 %v320
    %441 = vmatprep.subr.mxu0 0.0
    %442 = vmatpush1.msra.mxu0 %v319
    %443 = vmatprep.subr.mxu0 0.0
    %444 = vmatpush2.msra.mxu0 0.0
    %445 = vmatprep.subr.mxu0 0.0
    %446 = vmatpush2.msra.mxu0 0.0
    %447 = vmatprep.subr.mxu0 0.0
    %448 = vmatpush2.msra.mxu0 0.0
    %449 = vmatprep.subr.mxu0 0.0
    %450 = vmatpush2.msra.mxu0 0.0
    %451 = vmatprep.subr.mxu0 0.0
    %452 = vmatpush2.msra.mxu0 0.0
    %453 = vmatprep.subr.mxu0 0.0
    %454 = vmatpush2.msra.mxu0 0.0
    %455 = vmatprep.subr.mxu0 0.0
    %456 = vmatpush2.msra.mxu0 0.0
    %457 = vmatprep.subr.mxu0 0.0
    %458 = vmatpush2.msra.mxu0 0.0
    %459 = vmatprep.subr.mxu0 0.0
    %460 = vmatpush2.msra.mxu0 0.0
    %461 = vmatprep.subr.mxu0 0.0
    %462 = vmatpush2.msra.mxu0 0.0
    %463 = vmatprep.subr.mxu0 0.0
    %464 = vmatpush2.msra.mxu0 0.0
    %465 = vmatprep.subr.mxu0 0.0
    %466 = vmatpush2.msra.mxu0 0.0
    %467 = vmatprep.subr.mxu0 0.0
    %468 = vmatpush2.msra.mxu0 0.0
    %469 = vmatprep.subr.mxu0 0.0
    %470 = vmatpush2.msra.mxu0 0.0
    %471 = vmatprep.subr.mxu0 0.0
    %472 = vmatpush2.msra.mxu0 0.0
    %473 = vmatprep.subr.mxu0 0.0
    %474 = vmatpush2.msra.mxu0 0.0
    %475 = vmatprep.mubr.f32.mxu0 0.0
    %476 = vmatmul.mubr.f32.gmra.mxu0 %v406
    %v477 = vpop.f32.mrf.mxu0
    %v478 = vadd.f32 0.0, %v477
    %v479 = vpop.f32.mrf.mxu0
    %480 = vmatprep.mubr.f32.mxu0 0.0
    %481 = vmatmul.mubr.f32.gmra.mxu0 %v409
    %v482 = vpop.f32.mrf.mxu0
    %v483 = vadd.f32 0.0, %v482
    %v484 = vpop.f32.mrf.mxu0
    %485 = vdwg.mxu0
    %v486 = vadd.f32 %v251, %v478
    %v487 = vadd.f32 %v256, %v483
    %v488 = vtanh.pop %v486
    %v489 = vtanh.pop %v487
    %v491 = vsel %vm125, %v488, 0
    %v494 = vsel %vm125, %v489, 0
    %496 = vmatprep.subr.mxu0 0.0
    %497 = vmatpush1.msra.mxu0 0.0
    %498 = vmatprep.subr.mxu0 0.0
    %499 = vmatpush1.msra.mxu0 0.0
    %500 = vmatprep.subr.mxu0 0.0
    %501 = vmatpush1.msra.mxu0 0.0
    %502 = vmatprep.subr.mxu0 0.0
    %503 = vmatpush1.msra.mxu0 0.0
    %504 = vmatprep.subr.mxu0 0.0
    %505 = vmatpush1.msra.mxu0 0.0
    %506 = vmatprep.subr.mxu0 0.0
    %507 = vmatpush1.msra.mxu0 0.0
    %508 = vmatprep.subr.mxu0 0.0
    %509 = vmatpush1.msra.mxu0 0.0
    %510 = vmatprep.subr.mxu0 0.0
    %511 = vmatpush1.msra.mxu0 0.0
    %512 = vmatprep.subr.mxu0 0.0
    %513 = vmatpush1.msra.mxu0 0.0
    %514 = vmatprep.subr.mxu0 0.0
    %515 = vmatpush1.msra.mxu0 0.0
    %516 = vmatprep.subr.mxu0 0.0
    %517 = vmatpush1.msra.mxu0 0.0
    %518 = vmatprep.subr.mxu0 0.0
    %519 = vmatpush1.msra.mxu0 0.0
    %520 = vmatprep.subr.mxu0 0.0
    %521 = vmatpush1.msra.mxu0 %v322
    %522 = vmatprep.subr.mxu0 0.0
    %523 = vmatpush1.msra.mxu0 %v321
    %524 = vmatprep.subr.mxu0 0.0
    %525 = vmatpush1.msra.mxu0 %v320
    %526 = vmatprep.subr.mxu0 0.0
    %527 = vmatpush1.msra.mxu0 %v319
    %528 = vmatprep.subr.mxu0 0.0
    %529 = vmatpush2.msra.mxu0 0.0
    %530 = vmatprep.subr.mxu0 0.0
    %531 = vmatpush2.msra.mxu0 0.0
    %532 = vmatprep.subr.mxu0 0.0
    %533 = vmatpush2.msra.mxu0 0.0
    %534 = vmatprep.subr.mxu0 0.0
    %535 = vmatpush2.msra.mxu0 0.0
    %536 = vmatprep.subr.mxu0 0.0
    %537 = vmatpush2.msra.mxu0 0.0
    %538 = vmatprep.subr.mxu0 0.0
    %539 = vmatpush2.msra.mxu0 0.0
    %540 = vmatprep.subr.mxu0 0.0
    %541 = vmatpush2.msra.mxu0 0.0
    %542 = vmatprep.subr.mxu0 0.0
    %543 = vmatpush2.msra.mxu0 0.0
    %544 = vmatprep.subr.mxu0 0.0
    %545 = vmatpush2.msra.mxu0 0.0
    %546 = vmatprep.subr.mxu0 0.0
    %547 = vmatpush2.msra.mxu0 0.0
    %548 = vmatprep.subr.mxu0 0.0
    %549 = vmatpush2.msra.mxu0 0.0
    %550 = vmatprep.subr.mxu0 0.0
    %551 = vmatpush2.msra.mxu0 0.0
    %552 = vmatprep.subr.mxu0 0.0
    %553 = vmatpush2.msra.mxu0 0.0
    %554 = vmatprep.subr.mxu0 0.0
    %555 = vmatpush2.msra.mxu0 0.0
    %556 = vmatprep.subr.mxu0 0.0
    %557 = vmatpush2.msra.mxu0 0.0
    %558 = vmatprep.subr.mxu0 0.0
    %559 = vmatpush2.msra.mxu0 0.0
    %560 = vmatprep.mubr.f32.mxu0 0.0
    %561 = vmatmul.mubr.f32.gmra.mxu0 %v491
    %v562 = vpop.f32.mrf.mxu0
    %v563 = vadd.f32 0.0, %v562
    %v564 = vpop.f32.mrf.mxu0
    %565 = vmatprep.mubr.f32.mxu0 0.0
    %566 = vmatmul.mubr.f32.gmra.mxu0 %v494
    %v567 = vpop.f32.mrf.mxu0
    %v568 = vadd.f32 0.0, %v567
    %v569 = vpop.f32.mrf.mxu0
    %570 = vdwg.mxu0
    %v571 = vadd.f32 %v261, %v563
    %v572 = vadd.f32 %v266, %v568
    %v573 = vtanh.pop %v571
    %v574 = vtanh.pop %v572
    %v576 = vsel %vm125, %v573, 0
    %v579 = vsel %vm125, %v574, 0
    %581 = vmatprep.subr.mxu0 0.0
    %582 = vmatpush1.msra.mxu0 0.0
    %583 = vmatprep.subr.mxu0 0.0
    %584 = vmatpush1.msra.mxu0 0.0
    %585 = vmatprep.subr.mxu0 0.0
    %586 = vmatpush1.msra.mxu0 0.0
    %587 = vmatprep.subr.mxu0 0.0
    %588 = vmatpush1.msra.mxu0 0.0
    %589 = vmatprep.subr.mxu0 0.0
    %590 = vmatpush1.msra.mxu0 0.0
    %591 = vmatprep.subr.mxu0 0.0
    %592 = vmatpush1.msra.mxu0 0.0
    %593 = vmatprep.subr.mxu0 0.0
    %594 = vmatpush1.msra.mxu0 0.0
    %595 = vmatprep.subr.mxu0 0.0
    %596 = vmatpush1.msra.mxu0 0.0
    %597 = vmatprep.subr.mxu0 0.0
    %598 = vmatpush1.msra.mxu0 0.0
    %599 = vmatprep.subr.mxu0 0.0
    %600 = vmatpush1.msra.mxu0 0.0
    %601 = vmatprep.subr.mxu0 0.0
    %602 = vmatpush1.msra.mxu0 0.0
    %603 = vmatprep.subr.mxu0 0.0
    %604 = vmatpush1.msra.mxu0 0.0
    %605 = vmatprep.subr.mxu0 0.0
    %606 = vmatpush1.msra.mxu0 %v322
    %607 = vmatprep.subr.mxu0 0.0
    %608 = vmatpush1.msra.mxu0 %v321
    %609 = vmatprep.subr.mxu0 0.0
    %610 = vmatpush1.msra.mxu0 %v320
    %611 = vmatprep.subr.mxu0 0.0
    %612 = vmatpush1.msra.mxu0 %v319
    %613 = vmatprep.subr.mxu0 0.0
    %614 = vmatpush2.msra.mxu0 0.0
    %615 = vmatprep.subr.mxu0 0.0
    %616 = vmatpush2.msra.mxu0 0.0
    %617 = vmatprep.subr.mxu0 0.0
    %618 = vmatpush2.msra.mxu0 0.0
    %619 = vmatprep.subr.mxu0 0.0
    %620 = vmatpush2.msra.mxu0 0.0
    %621 = vmatprep.subr.mxu0 0.0
    %622 = vmatpush2.msra.mxu0 0.0
    %623 = vmatprep.subr.mxu0 0.0
    %624 = vmatpush2.msra.mxu0 0.0
    %625 = vmatprep.subr.mxu0 0.0
    %626 = vmatpush2.msra.mxu0 0.0
    %627 = vmatprep.subr.mxu0 0.0
    %628 = vmatpush2.msra.mxu0 0.0
    %629 = vmatprep.subr.mxu0 0.0
    %630 = vmatpush2.msra.mxu0 0.0
    %631 = vmatprep.subr.mxu0 0.0
    %632 = vmatpush2.msra.mxu0 0.0
    %633 = vmatprep.subr.mxu0 0.0
    %634 = vmatpush2.msra.mxu0 0.0
    %635 = vmatprep.subr.mxu0 0.0
    %636 = vmatpush2.msra.mxu0 0.0
    %637 = vmatprep.subr.mxu0 0.0
    %638 = vmatpush2.msra.mxu0 0.0
    %639 = vmatprep.subr.mxu0 0.0
    %640 = vmatpush2.msra.mxu0 0.0
    %641 = vmatprep.subr.mxu0 0.0
    %642 = vmatpush2.msra.mxu0 0.0
    %643 = vmatprep.subr.mxu0 0.0
    %644 = vmatpush2.msra.mxu0 0.0
    %645 = vmatprep.mubr.f32.mxu0 0.0
    %646 = vmatmul.mubr.f32.gmra.mxu0 %v576
    %v647 = vpop.f32.mrf.mxu0
    %v648 = vadd.f32 0.0, %v647
    %v649 = vpop.f32.mrf.mxu0
    %650 = vmatprep.mubr.f32.mxu0 0.0
    %651 = vmatmul.mubr.f32.gmra.mxu0 %v579
    %v652 = vpop.f32.mrf.mxu0
    %v653 = vadd.f32 0.0, %v652
    %v654 = vpop.f32.mrf.mxu0
    %655 = vdwg.mxu0
    %v656 = vadd.f32 %v271, %v648
    %v657 = vadd.f32 %v276, %v653
    %v658 = vtanh.pop %v656
    %v659 = vtanh.pop %v657
    %v661 = vsel %vm125, %v658, 0
    %v664 = vsel %vm125, %v659, 0
    %666 = vmatprep.subr.mxu0 0.0
    %667 = vmatpush1.msra.mxu0 0.0
    %668 = vmatprep.subr.mxu0 0.0
    %669 = vmatpush1.msra.mxu0 0.0
    %670 = vmatprep.subr.mxu0 0.0
    %671 = vmatpush1.msra.mxu0 0.0
    %672 = vmatprep.subr.mxu0 0.0
    %673 = vmatpush1.msra.mxu0 0.0
    %674 = vmatprep.subr.mxu0 0.0
    %675 = vmatpush1.msra.mxu0 0.0
    %676 = vmatprep.subr.mxu0 0.0
    %677 = vmatpush1.msra.mxu0 0.0
    %678 = vmatprep.subr.mxu0 0.0
    %679 = vmatpush1.msra.mxu0 0.0
    %680 = vmatprep.subr.mxu0 0.0
    %681 = vmatpush1.msra.mxu0 0.0
    %682 = vmatprep.subr.mxu0 0.0
    %683 = vmatpush1.msra.mxu0 0.0
    %684 = vmatprep.subr.mxu0 0.0
    %685 = vmatpush1.msra.mxu0 0.0
    %686 = vmatprep.subr.mxu0 0.0
    %687 = vmatpush1.msra.mxu0 0.0
    %688 = vmatprep.subr.mxu0 0.0
    %689 = vmatpush1.msra.mxu0 0.0
    %690 = vmatprep.subr.mxu0 0.0
    %691 = vmatpush1.msra.mxu0 %v322
    %692 = vmatprep.subr.mxu0 0.0
    %693 = vmatpush1.msra.mxu0 %v321
    %694 = vmatprep.subr.mxu0 0.0
    %695 = vmatpush1.msra.mxu0 %v320
    %696 = vmatprep.subr.mxu0 0.0
    %697 = vmatpush1.msra.mxu0 %v319
    %698 = vmatprep.subr.mxu0 0.0
    %699 = vmatpush2.msra.mxu0 0.0
    %700 = vmatprep.subr.mxu0 0.0
    %701 = vmatpush2.msra.mxu0 0.0
    %702 = vmatprep.subr.mxu0 0.0
    %703 = vmatpush2.msra.mxu0 0.0
    %704 = vmatprep.subr.mxu0 0.0
    %705 = vmatpush2.msra.mxu0 0.0
    %706 = vmatprep.subr.mxu0 0.0
    %707 = vmatpush2.msra.mxu0 0.0
    %708 = vmatprep.subr.mxu0 0.0
    %709 = vmatpush2.msra.mxu0 0.0
    %710 = vmatprep.subr.mxu0 0.0
    %711 = vmatpush2.msra.mxu0 0.0
    %712 = vmatprep.subr.mxu0 0.0
    %713 = vmatpush2.msra.mxu0 0.0
    %714 = vmatprep.subr.mxu0 0.0
    %715 = vmatpush2.msra.mxu0 0.0
    %716 = vmatprep.subr.mxu0 0.0
    %717 = vmatpush2.msra.mxu0 0.0
    %718 = vmatprep.subr.mxu0 0.0
    %719 = vmatpush2.msra.mxu0 0.0
    %720 = vmatprep.subr.mxu0 0.0
    %721 = vmatpush2.msra.mxu0 0.0
    %722 = vmatprep.subr.mxu0 0.0
    %723 = vmatpush2.msra.mxu0 0.0
    %724 = vmatprep.subr.mxu0 0.0
    %725 = vmatpush2.msra.mxu0 0.0
    %726 = vmatprep.subr.mxu0 0.0
    %727 = vmatpush2.msra.mxu0 0.0
    %728 = vmatprep.subr.mxu0 0.0
    %729 = vmatpush2.msra.mxu0 0.0
    %730 = vmatprep.mubr.f32.mxu0 0.0
    %731 = vmatmul.mubr.f32.gmra.mxu0 %v661
    %v732 = vpop.f32.mrf.mxu0
    %v733 = vadd.f32 0.0, %v732
    %v734 = vpop.f32.mrf.mxu0
    %735 = vmatprep.mubr.f32.mxu0 0.0
    %736 = vmatmul.mubr.f32.gmra.mxu0 %v664
    %v737 = vpop.f32.mrf.mxu0
    %v738 = vadd.f32 0.0, %v737
    %v739 = vpop.f32.mrf.mxu0
    %740 = vdwg.mxu0
    %v741 = vadd.f32 %v281, %v733
    %v742 = vadd.f32 %v286, %v738
    %v743 = vtanh.pop %v741
    %v744 = vtanh.pop %v742
    %v746 = vsel %vm125, %v743, 0
    %v749 = vsel %vm125, %v744, 0
    %751 = vmatprep.subr.mxu0 0.0
    %752 = vmatpush1.msra.mxu0 0.0
    %753 = vmatprep.subr.mxu0 0.0
    %754 = vmatpush1.msra.mxu0 0.0
    %755 = vmatprep.subr.mxu0 0.0
    %756 = vmatpush1.msra.mxu0 0.0
    %757 = vmatprep.subr.mxu0 0.0
    %758 = vmatpush1.msra.mxu0 0.0
    %759 = vmatprep.subr.mxu0 0.0
    %760 = vmatpush1.msra.mxu0 0.0
    %761 = vmatprep.subr.mxu0 0.0
    %762 = vmatpush1.msra.mxu0 0.0
    %763 = vmatprep.subr.mxu0 0.0
    %764 = vmatpush1.msra.mxu0 0.0
    %765 = vmatprep.subr.mxu0 0.0
    %766 = vmatpush1.msra.mxu0 0.0
    %767 = vmatprep.subr.mxu0 0.0
    %768 = vmatpush1.msra.mxu0 0.0
    %769 = vmatprep.subr.mxu0 0.0
    %770 = vmatpush1.msra.mxu0 0.0
    %771 = vmatprep.subr.mxu0 0.0
    %772 = vmatpush1.msra.mxu0 0.0
    %773 = vmatprep.subr.mxu0 0.0
    %774 = vmatpush1.msra.mxu0 0.0
    %775 = vmatprep.subr.mxu0 0.0
    %776 = vmatpush1.msra.mxu0 %v322
    %777 = vmatprep.subr.mxu0 0.0
    %778 = vmatpush1.msra.mxu0 %v321
    %779 = vmatprep.subr.mxu0 0.0
    %780 = vmatpush1.msra.mxu0 %v320
    %781 = vmatprep.subr.mxu0 0.0
    %782 = vmatpush1.msra.mxu0 %v319
    %783 = vmatprep.subr.mxu0 0.0
    %784 = vmatpush2.msra.mxu0 0.0
    %785 = vmatprep.subr.mxu0 0.0
    %786 = vmatpush2.msra.mxu0 0.0
    %787 = vmatprep.subr.mxu0 0.0
    %788 = vmatpush2.msra.mxu0 0.0
    %789 = vmatprep.subr.mxu0 0.0
    %790 = vmatpush2.msra.mxu0 0.0
    %791 = vmatprep.subr.mxu0 0.0
    %792 = vmatpush2.msra.mxu0 0.0
    %793 = vmatprep.subr.mxu0 0.0
    %794 = vmatpush2.msra.mxu0 0.0
    %795 = vmatprep.subr.mxu0 0.0
    %796 = vmatpush2.msra.mxu0 0.0
    %797 = vmatprep.subr.mxu0 0.0
    %798 = vmatpush2.msra.mxu0 0.0
    %799 = vmatprep.subr.mxu0 0.0
    %800 = vmatpush2.msra.mxu0 0.0
    %801 = vmatprep.subr.mxu0 0.0
    %802 = vmatpush2.msra.mxu0 0.0
    %803 = vmatprep.subr.mxu0 0.0
    %804 = vmatpush2.msra.mxu0 0.0
    %805 = vmatprep.subr.mxu0 0.0
    %806 = vmatpush2.msra.mxu0 0.0
    %807 = vmatprep.subr.mxu0 0.0
    %808 = vmatpush2.msra.mxu0 0.0
    %809 = vmatprep.subr.mxu0 0.0
    %810 = vmatpush2.msra.mxu0 0.0
    %811 = vmatprep.subr.mxu0 0.0
    %812 = vmatpush2.msra.mxu0 0.0
    %813 = vmatprep.subr.mxu0 0.0
    %814 = vmatpush2.msra.mxu0 0.0
    %815 = vmatprep.mubr.f32.mxu0 0.0
    %816 = vmatmul.mubr.f32.gmra.mxu0 %v746
    %v817 = vpop.f32.mrf.mxu0
    %v818 = vadd.f32 0.0, %v817
    %v819 = vpop.f32.mrf.mxu0
    %820 = vmatprep.mubr.f32.mxu0 0.0
    %821 = vmatmul.mubr.f32.gmra.mxu0 %v749
    %v822 = vpop.f32.mrf.mxu0
    %v823 = vadd.f32 0.0, %v822
    %v824 = vpop.f32.mrf.mxu0
    %825 = vdwg.mxu0
    %v826 = vadd.f32 %v291, %v818
    %v827 = vadd.f32 %v296, %v823
    %v828 = vtanh.pop %v826
    %v829 = vtanh.pop %v827
    %v831 = vsel %vm125, %v828, 0
    %v834 = vsel %vm125, %v829, 0
    %836 = vmatprep.subr.mxu0 0.0
    %837 = vmatpush1.msra.mxu0 0.0
    %838 = vmatprep.subr.mxu0 0.0
    %839 = vmatpush1.msra.mxu0 0.0
    %840 = vmatprep.subr.mxu0 0.0
    %841 = vmatpush1.msra.mxu0 0.0
    %842 = vmatprep.subr.mxu0 0.0
    %843 = vmatpush1.msra.mxu0 0.0
    %844 = vmatprep.subr.mxu0 0.0
    %845 = vmatpush1.msra.mxu0 0.0
    %846 = vmatprep.subr.mxu0 0.0
    %847 = vmatpush1.msra.mxu0 0.0
    %848 = vmatprep.subr.mxu0 0.0
    %849 = vmatpush1.msra.mxu0 0.0
    %850 = vmatprep.subr.mxu0 0.0
    %851 = vmatpush1.msra.mxu0 0.0
    %852 = vmatprep.subr.mxu0 0.0
    %853 = vmatpush1.msra.mxu0 0.0
    %854 = vmatprep.subr.mxu0 0.0
    %855 = vmatpush1.msra.mxu0 0.0
    %856 = vmatprep.subr.mxu0 0.0
    %857 = vmatpush1.msra.mxu0 0.0
    %858 = vmatprep.subr.mxu0 0.0
    %859 = vmatpush1.msra.mxu0 0.0
    %860 = vmatprep.subr.mxu0 0.0
    %861 = vmatpush1.msra.mxu0 %v322
    %862 = vmatprep.subr.mxu0 0.0
    %863 = vmatpush1.msra.mxu0 %v321
    %864 = vmatprep.subr.mxu0 0.0
    %865 = vmatpush1.msra.mxu0 %v320
    %866 = vmatprep.subr.mxu0 0.0
    %867 = vmatpush1.msra.mxu0 %v319
    %868 = vmatprep.subr.mxu0 0.0
    %869 = vmatpush2.msra.mxu0 0.0
    %870 = vmatprep.subr.mxu0 0.0
    %871 = vmatpush2.msra.mxu0 0.0
    %872 = vmatprep.subr.mxu0 0.0
    %873 = vmatpush2.msra.mxu0 0.0
    %874 = vmatprep.subr.mxu0 0.0
    %875 = vmatpush2.msra.mxu0 0.0
    %876 = vmatprep.subr.mxu0 0.0
    %877 = vmatpush2.msra.mxu0 0.0
    %878 = vmatprep.subr.mxu0 0.0
    %879 = vmatpush2.msra.mxu0 0.0
    %880 = vmatprep.subr.mxu0 0.0
    %881 = vmatpush2.msra.mxu0 0.0
    %882 = vmatprep.subr.mxu0 0.0
    %883 = vmatpush2.msra.mxu0 0.0
    %884 = vmatprep.subr.mxu0 0.0
    %885 = vmatpush2.msra.mxu0 0.0
    %886 = vmatprep.subr.mxu0 0.0
    %887 = vmatpush2.msra.mxu0 0.0
    %888 = vmatprep.subr.mxu0 0.0
    %889 = vmatpush2.msra.mxu0 0.0
    %890 = vmatprep.subr.mxu0 0.0
    %891 = vmatpush2.msra.mxu0 0.0
    %892 = vmatprep.subr.mxu0 0.0
    %893 = vmatpush2.msra.mxu0 0.0
    %894 = vmatprep.subr.mxu0 0.0
    %895 = vmatpush2.msra.mxu0 0.0
    %896 = vmatprep.subr.mxu0 0.0
    %897 = vmatpush2.msra.mxu0 0.0
    %898 = vmatprep.subr.mxu0 0.0
    %899 = vmatpush2.msra.mxu0 0.0
    %900 = vmatprep.mubr.f32.mxu0 0.0
    %901 = vmatmul.mubr.f32.gmra.mxu0 %v831
    %v902 = vpop.f32.mrf.mxu0
    %v903 = vadd.f32 0.0, %v902
    %v904 = vpop.f32.mrf.mxu0
    %905 = vmatprep.mubr.f32.mxu0 0.0
    %906 = vmatmul.mubr.f32.gmra.mxu0 %v834
    %v907 = vpop.f32.mrf.mxu0
    %v908 = vadd.f32 0.0, %v907
    %v909 = vpop.f32.mrf.mxu0
    %910 = vdwg.mxu0
    %v911 = vadd.f32 %v301, %v903
    %v912 = vadd.f32 %v306, %v908
    %v913 = vtanh.pop %v911
    %v914 = vtanh.pop %v912
    %v916 = vsel %vm125, %v913, 0
    %v919 = vsel %vm125, %v914, 0
    %921 = vmatprep.subr.mxu0 0.0
    %922 = vmatpush1.msra.mxu0 0.0
    %923 = vmatprep.subr.mxu0 0.0
    %924 = vmatpush1.msra.mxu0 0.0
    %925 = vmatprep.subr.mxu0 0.0
    %926 = vmatpush1.msra.mxu0 0.0
    %927 = vmatprep.subr.mxu0 0.0
    %928 = vmatpush1.msra.mxu0 0.0
    %929 = vmatprep.subr.mxu0 0.0
    %930 = vmatpush1.msra.mxu0 0.0
    %931 = vmatprep.subr.mxu0 0.0
    %932 = vmatpush1.msra.mxu0 0.0
    %933 = vmatprep.subr.mxu0 0.0
    %934 = vmatpush1.msra.mxu0 0.0
    %935 = vmatprep.subr.mxu0 0.0
    %936 = vmatpush1.msra.mxu0 0.0
    %937 = vmatprep.subr.mxu0 0.0
    %938 = vmatpush1.msra.mxu0 0.0
    %939 = vmatprep.subr.mxu0 0.0
    %940 = vmatpush1.msra.mxu0 0.0
    %941 = vmatprep.subr.mxu0 0.0
    %942 = vmatpush1.msra.mxu0 0.0
    %943 = vmatprep.subr.mxu0 0.0
    %944 = vmatpush1.msra.mxu0 0.0
    %945 = vmatprep.subr.mxu0 0.0
    %946 = vmatpush1.msra.mxu0 %v322
    %947 = vmatprep.subr.mxu0 0.0
    %948 = vmatpush1.msra.mxu0 %v321
    %949 = vmatprep.subr.mxu0 0.0
    %950 = vmatpush1.msra.mxu0 %v320
    %951 = vmatprep.subr.mxu0 0.0
    %952 = vmatpush1.msra.mxu0 %v319
    %953 = vmatprep.subr.mxu0 0.0
    %954 = vmatpush2.msra.mxu0 0.0
    %955 = vmatprep.subr.mxu0 0.0
    %956 = vmatpush2.msra.mxu0 0.0
    %957 = vmatprep.subr.mxu0 0.0
    %958 = vmatpush2.msra.mxu0 0.0
    %959 = vmatprep.subr.mxu0 0.0
    %960 = vmatpush2.msra.mxu0 0.0
    %961 = vmatprep.subr.mxu0 0.0
    %962 = vmatpush2.msra.mxu0 0.0
    %963 = vmatprep.subr.mxu0 0.0
    %964 = vmatpush2.msra.mxu0 0.0
    %965 = vmatprep.subr.mxu0 0.0
    %966 = vmatpush2.msra.mxu0 0.0
    %967 = vmatprep.subr.mxu0 0.0
    %968 = vmatpush2.msra.mxu0 0.0
    %969 = vmatprep.subr.mxu0 0.0
    %970 = vmatpush2.msra.mxu0 0.0
    %971 = vmatprep.subr.mxu0 0.0
    %972 = vmatpush2.msra.mxu0 0.0
    %973 = vmatprep.subr.mxu0 0.0
    %974 = vmatpush2.msra.mxu0 0.0
    %975 = vmatprep.subr.mxu0 0.0
    %976 = vmatpush2.msra.mxu0 0.0
    %977 = vmatprep.subr.mxu0 0.0
    %978 = vmatpush2.msra.mxu0 0.0
    %979 = vmatprep.subr.mxu0 0.0
    %980 = vmatpush2.msra.mxu0 0.0
    %981 = vmatprep.subr.mxu0 0.0
    %982 = vmatpush2.msra.mxu0 0.0
    %983 = vmatprep.subr.mxu0 0.0
    %984 = vmatpush2.msra.mxu0 0.0
    %985 = vmatprep.mubr.f32.mxu0 0.0
    %986 = vmatmul.mubr.f32.gmra.mxu0 %v916
    %v987 = vpop.f32.mrf.mxu0
    %v988 = vadd.f32 0.0, %v987
    %v989 = vpop.f32.mrf.mxu0
    %990 = vmatprep.mubr.f32.mxu0 0.0
    %991 = vmatmul.mubr.f32.gmra.mxu0 %v919
    %v992 = vpop.f32.mrf.mxu0
    %v993 = vadd.f32 0.0, %v992
    %v994 = vpop.f32.mrf.mxu0
    %995 = vdwg.mxu0
    %v996 = vadd.f32 %v311, %v988
    %v997 = vadd.f32 %v316, %v993
    %v998 = vtanh.pop %v996
    %v999 = vtanh.pop %v997
    %v1000 = vld [vmem:[#allocation8] sm:$0xff]
    %v1001 = vld [vmem:[#allocation8 + $0x8] sm:$0xff]
    %v1002 = vld [vmem:[#allocation8 + $0x10] sm:$0xff]
    %v1003 = vld [vmem:[#allocation8 + $0x18] sm:$0xff]
    %v1004 = vld [vmem:[%s5] sm:$0x1]
    %v1006 = vlaneseq
    %v1007 = vshrl.u32 %v1006, 7
    %v1008 = vsub.s32 0, %v1007
    %v1009 = vrot.slane %v1004, %v1008
    %v1012 = vsel %vm125, %v998, 0
    %v1015 = vsel %vm125, %v999, 0
    %1017 = vmatprep.subr.mxu0 0.0
    %1018 = vmatpush1.msra.mxu0 0.0
    %1019 = vmatprep.subr.mxu0 0.0
    %1020 = vmatpush1.msra.mxu0 0.0
    %1021 = vmatprep.subr.mxu0 0.0
    %1022 = vmatpush1.msra.mxu0 0.0
    %1023 = vmatprep.subr.mxu0 0.0
    %1024 = vmatpush1.msra.mxu0 0.0
    %1025 = vmatprep.subr.mxu0 0.0
    %1026 = vmatpush1.msra.mxu0 0.0
    %1027 = vmatprep.subr.mxu0 0.0
    %1028 = vmatpush1.msra.mxu0 0.0
    %1029 = vmatprep.subr.mxu0 0.0
    %1030 = vmatpush1.msra.mxu0 0.0
    %1031 = vmatprep.subr.mxu0 0.0
    %1032 = vmatpush1.msra.mxu0 0.0
    %1033 = vmatprep.subr.mxu0 0.0
    %1034 = vmatpush1.msra.mxu0 0.0
    %1035 = vmatprep.subr.mxu0 0.0
    %1036 = vmatpush1.msra.mxu0 0.0
    %1037 = vmatprep.subr.mxu0 0.0
    %1038 = vmatpush1.msra.mxu0 0.0
    %1039 = vmatprep.subr.mxu0 0.0
    %1040 = vmatpush1.msra.mxu0 0.0
    %1041 = vmatprep.subr.mxu0 0.0
    %1042 = vmatpush1.msra.mxu0 %v1003
    %1043 = vmatprep.subr.mxu0 0.0
    %1044 = vmatpush1.msra.mxu0 %v1002
    %1045 = vmatprep.subr.mxu0 0.0
    %1046 = vmatpush1.msra.mxu0 %v1001
    %1047 = vmatprep.subr.mxu0 0.0
    %1048 = vmatpush1.msra.mxu0 %v1000
    %1049 = vmatprep.subr.mxu0 0.0
    %1050 = vmatpush2.msra.mxu0 0.0
    %1051 = vmatprep.subr.mxu0 0.0
    %1052 = vmatpush2.msra.mxu0 0.0
    %1053 = vmatprep.subr.mxu0 0.0
    %1054 = vmatpush2.msra.mxu0 0.0
    %1055 = vmatprep.subr.mxu0 0.0
    %1056 = vmatpush2.msra.mxu0 0.0
    %1057 = vmatprep.subr.mxu0 0.0
    %1058 = vmatpush2.msra.mxu0 0.0
    %1059 = vmatprep.subr.mxu0 0.0
    %1060 = vmatpush2.msra.mxu0 0.0
    %1061 = vmatprep.subr.mxu0 0.0
    %1062 = vmatpush2.msra.mxu0 0.0
    %1063 = vmatprep.subr.mxu0 0.0
    %1064 = vmatpush2.msra.mxu0 0.0
    %1065 = vmatprep.subr.mxu0 0.0
    %1066 = vmatpush2.msra.mxu0 0.0
    %1067 = vmatprep.subr.mxu0 0.0
    %1068 = vmatpush2.msra.mxu0 0.0
    %1069 = vmatprep.subr.mxu0 0.0
    %1070 = vmatpush2.msra.mxu0 0.0
    %1071 = vmatprep.subr.mxu0 0.0
    %1072 = vmatpush2.msra.mxu0 0.0
    %1073 = vmatprep.subr.mxu0 0.0
    %1074 = vmatpush2.msra.mxu0 0.0
    %1075 = vmatprep.subr.mxu0 0.0
    %1076 = vmatpush2.msra.mxu0 0.0
    %1077 = vmatprep.subr.mxu0 0.0
    %1078 = vmatpush2.msra.mxu0 0.0
    %1079 = vmatprep.subr.mxu0 0.0
    %1080 = vmatpush2.msra.mxu0 0.0
    %1081 = vmatprep.mubr.f32.mxu0 0.0
    %1082 = vmatmul.mubr.f32.gmra.mxu0 %v1012
    %v1083 = vpop.f32.mrf.mxu0
    %v1084 = vadd.f32 %v1009, %v1083
    %v1085 = vpop.f32.mrf.mxu0
    %1086 = vmatprep.mubr.f32.mxu0 0.0
    %1087 = vmatmul.mubr.f32.gmra.mxu0 %v1015
    %v1088 = vpop.f32.mrf.mxu0
    %v1089 = vadd.f32 %v1009, %v1088
    %v1090 = vpop.f32.mrf.mxu0
    %1091 = vdwg.mxu0
    %v1092 = vmax.f32 %v1084, 0.0
    %v1093 = vmax.f32 %v1089, 0.0
    %v1094 = vld [vmem:[#allocation10] sm:$0xff]
    %v1095 = vld [vmem:[#allocation10 + $0x8] sm:$0xff]
    %v1096 = vld [vmem:[#allocation10 + $0x10] sm:$0xff]
    %v1097 = vld [vmem:[#allocation10 + $0x18] sm:$0xff]
    %v1098 = vld [vmem:[%s7] sm:$0x1]
    %v1100 = vlaneseq
    %v1101 = vshrl.u32 %v1100, 7
    %v1102 = vsub.s32 0, %v1101
    %v1103 = vrot.slane %v1098, %v1102
    %v1106 = vsel %vm125, %v1092, 0
    %v1109 = vsel %vm125, %v1093, 0
    %1111 = vmatprep.subr.mxu0 0.0
    %1112 = vmatpush1.msra.mxu0 0.0
    %1113 = vmatprep.subr.mxu0 0.0
    %1114 = vmatpush1.msra.mxu0 0.0
    %1115 = vmatprep.subr.mxu0 0.0
    %1116 = vmatpush1.msra.mxu0 0.0
    %1117 = vmatprep.subr.mxu0 0.0
    %1118 = vmatpush1.msra.mxu0 0.0
    %1119 = vmatprep.subr.mxu0 0.0
    %1120 = vmatpush1.msra.mxu0 0.0
    %1121 = vmatprep.subr.mxu0 0.0
    %1122 = vmatpush1.msra.mxu0 0.0
    %1123 = vmatprep.subr.mxu0 0.0
    %1124 = vmatpush1.msra.mxu0 0.0
    %1125 = vmatprep.subr.mxu0 0.0
    %1126 = vmatpush1.msra.mxu0 0.0
    %1127 = vmatprep.subr.mxu0 0.0
    %1128 = vmatpush1.msra.mxu0 0.0
    %1129 = vmatprep.subr.mxu0 0.0
    %1130 = vmatpush1.msra.mxu0 0.0
    %1131 = vmatprep.subr.mxu0 0.0
    %1132 = vmatpush1.msra.mxu0 0.0
    %1133 = vmatprep.subr.mxu0 0.0
    %1134 = vmatpush1.msra.mxu0 0.0
    %1135 = vmatprep.subr.mxu0 0.0
    %1136 = vmatpush1.msra.mxu0 %v1097
    %1137 = vmatprep.subr.mxu0 0.0
    %1138 = vmatpush1.msra.mxu0 %v1096
    %1139 = vmatprep.subr.mxu0 0.0
    %1140 = vmatpush1.msra.mxu0 %v1095
    %1141 = vmatprep.subr.mxu0 0.0
    %1142 = vmatpush1.msra.mxu0 %v1094
    %1143 = vmatprep.subr.mxu0 0.0
    %1144 = vmatpush2.msra.mxu0 0.0
    %1145 = vmatprep.subr.mxu0 0.0
    %1146 = vmatpush2.msra.mxu0 0.0
    %1147 = vmatprep.subr.mxu0 0.0
    %1148 = vmatpush2.msra.mxu0 0.0
    %1149 = vmatprep.subr.mxu0 0.0
    %1150 = vmatpush2.msra.mxu0 0.0
    %1151 = vmatprep.subr.mxu0 0.0
    %1152 = vmatpush2.msra.mxu0 0.0
    %1153 = vmatprep.subr.mxu0 0.0
    %1154 = vmatpush2.msra.mxu0 0.0
    %1155 = vmatprep.subr.mxu0 0.0
    %1156 = vmatpush2.msra.mxu0 0.0
    %1157 = vmatprep.subr.mxu0 0.0
    %1158 = vmatpush2.msra.mxu0 0.0
    %1159 = vmatprep.subr.mxu0 0.0
    %1160 = vmatpush2.msra.mxu0 0.0
    %1161 = vmatprep.subr.mxu0 0.0
    %1162 = vmatpush2.msra.mxu0 0.0
    %1163 = vmatprep.subr.mxu0 0.0
    %1164 = vmatpush2.msra.mxu0 0.0
    %1165 = vmatprep.subr.mxu0 0.0
    %1166 = vmatpush2.msra.mxu0 0.0
    %1167 = vmatprep.subr.mxu0 0.0
    %1168 = vmatpush2.msra.mxu0 0.0
    %1169 = vmatprep.subr.mxu0 0.0
    %1170 = vmatpush2.msra.mxu0 0.0
    %1171 = vmatprep.subr.mxu0 0.0
    %1172 = vmatpush2.msra.mxu0 0.0
    %1173 = vmatprep.subr.mxu0 0.0
    %1174 = vmatpush2.msra.mxu0 0.0
    %1175 = vmatprep.mubr.f32.mxu0 0.0
    %1176 = vmatmul.mubr.f32.gmra.mxu0 %v1106
    %v1177 = vpop.f32.mrf.mxu0
    %v1178 = vadd.f32 %v1103, %v1177
    %v1179 = vpop.f32.mrf.mxu0
    %1180 = vmatprep.mubr.f32.mxu0 0.0
    %1181 = vmatmul.mubr.f32.gmra.mxu0 %v1109
    %v1182 = vpop.f32.mrf.mxu0
    %v1183 = vadd.f32 %v1103, %v1182
    %v1184 = vpop.f32.mrf.mxu0
    %1185 = vdwg.mxu0
    %1186 = vst [vmem:[#allocation11] sm:$0xff] %v1178
    %1187 = vst [vmem:[#allocation11 + $0x8] sm:$0xff] %v1183
    // Predicated region
    $region54: #{tpu_custom_call.1} parent=1 // pred_check
      _
    $region55: #{tpu_custom_call.1} parent=1 // pred_check_branch
      %1189 = sbr.rel (0) target = $region57
    $region56: #{tpu_custom_call.1} parent=1 // pred_region
      %s1191 = ssub.s32 256, 256
      %1192 = vsyncadd [#allocation4], %s1191
      %s1193 = sshll.u32 [#allocation11], 4
      %s1194 = int_to_ptr.vmem [resolvable:$true] %s1193
      %1199 = dma.vmem_to_hbm [thread:$0]  %s1194, 256, %s8, [#allocation4], 128, 128, 8
    $region57: #{tpu_custom_call.1} parent=1 // pred_fallthru
      _
    // Predicated region
    $region58: #{tpu_custom_call.1} parent=1 // pred_check
      _
    $region59: #{tpu_custom_call.1} parent=1 // pred_check_branch
      %1201 = sbr.rel (0) target = $region61
    $region60: #{tpu_custom_call.1} parent=1 // pred_region
      %1202 = dma.done [#allocation4], 256
    $region61: #{tpu_custom_call.1} parent=1 // pred_fallthru
      _
    %1203 = vsyncpa [#allocation3], 1
    %1204 = vsyncpa [#allocation6], 1
    %1205 = vsyncpa [#allocation9], 1
    %1206 = vsyncpa [#allocation4], 1

</llo_original>
